<compile_context>
chip_gen: v6e
topology: v6e:2x2x1
jax: 0.10.0
libtpu: 0.0.40
codegen_flags: <defaults>
</compile_context>

<pallas_src>
import jax
import jax.numpy as jnp
from jax.experimental import pallas as pl
from jax.experimental.pallas import tpu as pltpu

NEG_SLOPE = 0.01  # F.leaky_relu default negative_slope


def fusion_attention_kernel(x_ref, w1_ref, b1_ref, w2_ref, vec_ref, wgt_ref):
    # x_ref: (TB, S, D) storage dtype; w1: (D, D) storage dtype;
    # b1: (1, D) f32; w2: (1, D) f32 row (== PyTorch weight[:, 0]).
    tb, s, d = x_ref.shape
    x_raw = x_ref[...]                                   # (TB, S, D) storage dtype
    x = x_raw.astype(jnp.float32)                        # f32 for VPU math

    # ---- Linear(D, D) + LeakyReLU: one fat (TB*S, D) MXU matmul, f32 accum. ----
    q = jnp.dot(x_raw.reshape(tb * s, d), w1_ref[...],
                preferred_element_type=jnp.float32) + b1_ref[...]
    q = jnp.where(q >= 0, q, NEG_SLOPE * q)              # (TB*S, D) f32

    # ---- Linear(D, 1): lane-reduce over D (no N=1 matmul); scores (TB, S). ----
    # b2 omitted: uniform scalar over the softmax axis is a softmax no-op.
    pv = jnp.sum(q.reshape(tb, s, d) * w2_ref[...], axis=-1)   # (TB, S)

    # ---- softmax over S (lane axis); exact normalisation. ----
    m = jnp.max(pv, axis=-1, keepdims=True)
    e = jnp.exp(pv - m)
    aw = e * pl.reciprocal(jnp.sum(e, axis=-1, keepdims=True), approx=False)

    # ---- attention_vec = sum_S aw * x: VPU multiply + sublane reduction. ----
    vec_ref[...] = jnp.sum(aw[:, :, None] * x, axis=1)   # (TB, D)
    wgt_ref[...] = aw                                    # lane-dense enough; tiny traffic


def _round_up(v, m):
    return ((v + m - 1) // m) * m


def _choose_tb(B, S, D, target_rows=2048, max_block_bytes=8 << 20):
    """Batches per grid step: ~2048 MXU rows, x block capped at ~8 MiB (fits
    double-buffered under every generation's scoped-VMEM limit), and >= 2 grid
    steps whenever the batch allows so v7x can shard across both TensorCores."""
    tb = max(1, target_rows // max(S, 1))
    tb = min(tb, max(1, max_block_bytes // max(4 * S * D, 1)))
    b8 = _round_up(max(B, 1), 8)
    if b8 >= 16:
        tb = min(tb, b8 // 2)      # keep at least 2 grid steps
    tb = min(tb, b8)               # don't over-pad tiny batches
    return max(8, _round_up(tb, 8))


def fusion_attention(x, w1, b1, w2, b2=None, *, tb=None,
                     storage_dtype=jnp.float32, vmem_limit_bytes=32 << 20):
    """FusionAttention forward.  b2 is accepted for API parity with the module
    but is mathematically a no-op (softmax shift invariance) and is unused."""
    del b2
    B, S, D = x.shape
    if tb is None:
        tb = _choose_tb(B, S, D)

    # Pad the batch to a multiple of tb; padded zero rows give uniform softmax
    # rows and zero vectors (NaN-free) and are sliced off below.
    Bp = _round_up(B, tb)
    x_in = jnp.pad(x, ((0, Bp - B), (0, 0), (0, 0))) if Bp != B else x

    x_in = x_in.astype(storage_dtype)               # bf16 storage halves HBM traffic (v6e/v7x)
    w1_in = w1.astype(storage_dtype)                # (D, D) MXU operand
    b1_2d = b1.reshape(1, D).astype(jnp.float32)    # (1, D)
    w2_row = w2.reshape(1, D).astype(jnp.float32)   # (1, D) == w2[:, 0]

    out_shapes = (
        jax.ShapeDtypeStruct((Bp, D), jnp.float32),   # attention_vec
        jax.ShapeDtypeStruct((Bp, S), jnp.float32),   # attention_weight (squeezed)
    )

    grid_spec = pltpu.PrefetchScalarGridSpec(
        num_scalar_prefetch=0,
        grid=(Bp // tb,),
        in_specs=[
            pl.BlockSpec((tb, S, D), lambda b: (b, 0, 0)),   # x
            pl.BlockSpec((D, D), lambda b: (0, 0)),          # W1 (resident across steps)
            pl.BlockSpec((1, D), lambda b: (0, 0)),          # b1
            pl.BlockSpec((1, D), lambda b: (0, 0)),          # W2 row
        ],
        out_specs=[
            pl.BlockSpec((tb, D), lambda b: (b, 0)),         # attention_vec
            pl.BlockSpec((tb, S), lambda b: (b, 0)),         # attention_weight
        ],
    )

    itemsize = jnp.dtype(storage_dtype).itemsize
    cost = pl.CostEstimate(
        flops=2 * Bp * S * D * (D + 2),
        transcendentals=Bp * S,
        bytes_accessed=(Bp * S * D * itemsize + D * D * itemsize + 2 * D * 4
                        + Bp * D * 4 + Bp * S * 4),
    )

    vec_p, wgt_p = pl.pallas_call(
        fusion_attention_kernel,
        out_shape=out_shapes,
        grid_spec=grid_spec,
        cost_estimate=cost,
        compiler_params=pltpu.CompilerParams(
            dimension_semantics=("parallel",),      # shards batch steps across v7x's 2 TCs
            vmem_limit_bytes=vmem_limit_bytes),
    )(x_in, w1_in, b1_2d, w2_row)

    vec = vec_p[:B]
    wgt = wgt_p[:B].reshape(B, S, 1)   # module's attention_weight layout
    return vec, wgt


def fusion_attention_ref(x, w1, b1, w2, b2):
    q = x @ w1 + b1
    q = jnp.where(q >= 0, q, NEG_SLOPE * q)
    pv = q @ w2 + b2                       # (B, S, 1)
    aw = jax.nn.softmax(pv, axis=1)        # (B, S, 1)
    vec = jnp.sum(x * aw, axis=1)          # (B, D)
    return vec, aw


if __name__ == "__main__":
    # TODO(synk): only the FusionAttention block of DATE is kernelized here;
    # embeddings / MultiHeadAttention / Attention / LayerNorm / output heads stay in XLA.
    key = jax.random.PRNGKey(0)
    kx, kw1, kb1, kw2, kb2, kx2 = jax.random.split(key, 6)

    D, S = 32, 8
    w1 = jax.random.normal(kw1, (D, D), dtype=jnp.float32) * 0.1
    b1 = jax.random.normal(kb1, (D,), dtype=jnp.float32) * 0.1
    w2 = jax.random.normal(kw2, (D, 1), dtype=jnp.float32) * 0.1
    b2 = jax.random.normal(kb2, (1,), dtype=jnp.float32) * 0.1

    ok = True

    # Case 1: tiny batch (module-scale shapes), single padded grid step, f32.
    x = jax.random.normal(kx, (2, S, D), dtype=jnp.float32)
    vec, wgt = fusion_attention(x, w1, b1, w2, b2)
    jax.block_until_ready((vec, wgt))
    vec_r, wgt_r = fusion_attention_ref(x, w1, b1, w2, b2)
    ok &= bool(jnp.allclose(vec, vec_r, atol=2e-3, rtol=2e-3))
    ok &= bool(jnp.allclose(wgt, wgt_r, atol=2e-3, rtol=2e-3))

    # Case 2: ragged batch exercising >=2 grid steps + tail padding, f32.
    x2 = jax.random.normal(kx2, (50, S, D), dtype=jnp.float32)
    vec2, wgt2 = fusion_attention(x2, w1, b1, w2, b2)
    jax.block_until_ready((vec2, wgt2))
    vec2_r, wgt2_r = fusion_attention_ref(x2, w1, b1, w2, b2)
    ok &= bool(jnp.allclose(vec2, vec2_r, atol=2e-3, rtol=2e-3))
    ok &= bool(jnp.allclose(wgt2, wgt2_r, atol=2e-3, rtol=2e-3))

    # Case 3: bf16 HBM storage (v6e/v7x bandwidth optimization); softmax and
    # accumulation stay f32 in-kernel, so only bf16 rounding of x/W1 remains.
    vec3, wgt3 = fusion_attention(x2, w1, b1, w2, b2, storage_dtype=jnp.bfloat16)
    jax.block_until_ready((vec3, wgt3))
    ok &= bool(jnp.allclose(vec3, vec2_r, atol=2e-2, rtol=2e-2))
    ok &= bool(jnp.allclose(wgt3, wgt2_r, atol=2e-2, rtol=2e-2))

    assert ok, "mismatch vs reference"
    print("KERNEL_OK")
</pallas_src>

<mosaic_0001>
module attributes {stable_mosaic.version = 11 : i64} {
  func.func @fusion_attention_kernel(%arg0: i32, %arg1: memref<8x8x32xf32, #tpu.memory_space<vmem>>, %arg2: memref<32x32xf32, #tpu.memory_space<vmem>>, %arg3: memref<1x32xf32, #tpu.memory_space<vmem>>, %arg4: memref<1x32xf32, #tpu.memory_space<vmem>>, %arg5: memref<8x32xf32, #tpu.memory_space<vmem>>, %arg6: memref<8x8xf32, #tpu.memory_space<vmem>>) attributes {dimension_semantics = [#tpu.dimension_semantics<parallel>], iteration_bounds = array<i64: 1>, scalar_prefetch = 0 : i64, scratch_operands = 0 : i64, tpu.core_type = #tpu.core_type<tc>, window_params = [{transform_indices = @transform_0, window_bounds = array<i64: 8, 8, 32>}, {pipeline_mode = #tpu.pipeline_mode<synchronous>, transform_indices = @transform_1, window_bounds = array<i64: 32, 32>}, {pipeline_mode = #tpu.pipeline_mode<synchronous>, transform_indices = @transform_2, window_bounds = array<i64: 1, 32>}, {pipeline_mode = #tpu.pipeline_mode<synchronous>, transform_indices = @transform_3, window_bounds = array<i64: 1, 32>}, {transform_indices = @transform_4, window_bounds = array<i64: 8, 32>}, {transform_indices = @transform_5, window_bounds = array<i64: 8, 8>}]} {
    %c0 = arith.constant 0 : index
    %c0_0 = arith.constant 0 : index
    %c0_1 = arith.constant 0 : index
    %0 = vector.load %arg1[%c0, %c0_0, %c0_1] : memref<8x8x32xf32, #tpu.memory_space<vmem>>, vector<8x8x32xf32>
    %1 = vector.shape_cast %0 : vector<8x8x32xf32> to vector<64x32xf32>
    %c0_2 = arith.constant 0 : index
    %c0_3 = arith.constant 0 : index
    %2 = vector.load %arg2[%c0_2, %c0_3] : memref<32x32xf32, #tpu.memory_space<vmem>>, vector<32x32xf32>
    %cst = arith.constant dense<0.000000e+00> : vector<64x32xf32>
    %3 = tpu.matmul %1, %2, %cst {dimension_numbers = #tpu.dot_dimension_numbers<[1], [0], [0], [1], [0, 0, 1, 1], [], []>} : vector<64x32xf32>, vector<32x32xf32>, vector<64x32xf32> -> vector<64x32xf32>
    %c0_4 = arith.constant 0 : index
    %c0_5 = arith.constant 0 : index
    %4 = vector.load %arg3[%c0_4, %c0_5] : memref<1x32xf32, #tpu.memory_space<vmem>>, vector<1x32xf32>
    %5 = vector.broadcast %4 : vector<1x32xf32> to vector<64x32xf32>
    %6 = arith.addf %3, %5 : vector<64x32xf32>
    %cst_6 = arith.constant 0.000000e+00 : f32
    %7 = vector.broadcast %cst_6 : f32 to vector<64x32xf32>
    %8 = arith.cmpf oge, %6, %7 : vector<64x32xf32>
    %cst_7 = arith.constant 0.00999999977 : f32
    %9 = vector.broadcast %cst_7 : f32 to vector<64x32xf32>
    %10 = arith.mulf %9, %6 : vector<64x32xf32>
    %11 = arith.select %8, %6, %10 : vector<64x32xi1>, vector<64x32xf32>
    %12 = vector.shape_cast %11 : vector<64x32xf32> to vector<8x8x32xf32>
    %c0_8 = arith.constant 0 : index
    %c0_9 = arith.constant 0 : index
    %13 = vector.load %arg4[%c0_8, %c0_9] : memref<1x32xf32, #tpu.memory_space<vmem>>, vector<1x32xf32>
    %14 = vector.shape_cast %13 : vector<1x32xf32> to vector<1x1x32xf32>
    %15 = vector.broadcast %14 : vector<1x1x32xf32> to vector<8x8x32xf32>
    %16 = arith.mulf %12, %15 : vector<8x8x32xf32>
    %cst_10 = arith.constant dense<0.000000e+00> : vector<8x8xf32>
    %17 = vector.multi_reduction <add>, %16, %cst_10 [2] : vector<8x8x32xf32> to vector<8x8xf32>
    %cst_11 = arith.constant dense<0xFF800000> : vector<8xf32>
    %18 = vector.multi_reduction <maximumf>, %17, %cst_11 [1] : vector<8x8xf32> to vector<8xf32>
    %19 = vector.shape_cast %18 : vector<8xf32> to vector<8x1xf32>
    %20 = vector.broadcast %19 : vector<8x1xf32> to vector<8x8xf32>
    %21 = arith.subf %17, %20 : vector<8x8xf32>
    %22 = math.exp %21 : vector<8x8xf32>
    %cst_12 = arith.constant dense<0.000000e+00> : vector<8xf32>
    %23 = vector.multi_reduction <add>, %22, %cst_12 [1] : vector<8x8xf32> to vector<8xf32>
    %24 = vector.shape_cast %23 : vector<8xf32> to vector<8x1xf32>
    %25 = tpu.reciprocal %24 : vector<8x1xf32> -> vector<8x1xf32>
    %26 = vector.broadcast %25 : vector<8x1xf32> to vector<8x8xf32>
    %27 = arith.mulf %22, %26 : vector<8x8xf32>
    %28 = vector.shape_cast %27 : vector<8x8xf32> to vector<8x8x1xf32>
    %29 = vector.broadcast %28 : vector<8x8x1xf32> to vector<8x8x32xf32>
    %30 = arith.mulf %29, %0 : vector<8x8x32xf32>
    %cst_13 = arith.constant dense<0.000000e+00> : vector<8x32xf32>
    %31 = vector.multi_reduction <add>, %30, %cst_13 [1] : vector<8x8x32xf32> to vector<8x32xf32>
    %c0_14 = arith.constant 0 : index
    %c0_15 = arith.constant 0 : index
    %32 = vector.load %arg5[%c0_14, %c0_15] : memref<8x32xf32, #tpu.memory_space<vmem>>, vector<8x32xf32>
    tpu.vector_store %arg5[%c0_14, %c0_15], %31 {strides = array<i32>} : memref<8x32xf32, #tpu.memory_space<vmem>>, vector<8x32xf32>,
    %c0_16 = arith.constant 0 : index
    %c0_17 = arith.constant 0 : index
    %33 = vector.load %arg6[%c0_16, %c0_17] : memref<8x8xf32, #tpu.memory_space<vmem>>, vector<8x8xf32>
    tpu.vector_store %arg6[%c0_16, %c0_17], %27 {strides = array<i32>} : memref<8x8xf32, #tpu.memory_space<vmem>>, vector<8x8xf32>,
    return
  }
  func.func @transform_0(%arg0: i32) -> (i32, i32, i32) {
    %c0_i32 = arith.constant 0 : i32
    %c0_i32_0 = arith.constant 0 : i32
    %c0_i32_1 = arith.constant 0 : i32
    return %arg0, %c0_i32, %c0_i32_0 : i32, i32, i32
  }
  func.func @transform_1(%arg0: i32) -> (i32, i32) {
    %c0_i32 = arith.constant 0 : i32
    %c0_i32_0 = arith.constant 0 : i32
    %c0_i32_1 = arith.constant 0 : i32
    return %c0_i32, %c0_i32_0 : i32, i32
  }
  func.func @transform_2(%arg0: i32) -> (i32, i32) {
    %c0_i32 = arith.constant 0 : i32
    %c0_i32_0 = arith.constant 0 : i32
    %c0_i32_1 = arith.constant 0 : i32
    return %c0_i32, %c0_i32_0 : i32, i32
  }
  func.func @transform_3(%arg0: i32) -> (i32, i32) {
    %c0_i32 = arith.constant 0 : i32
    %c0_i32_0 = arith.constant 0 : i32
    %c0_i32_1 = arith.constant 0 : i32
    return %c0_i32, %c0_i32_0 : i32, i32
  }
  func.func @transform_4(%arg0: i32) -> (i32, i32) {
    %c0_i32 = arith.constant 0 : i32
    %c0_i32_0 = arith.constant 0 : i32
    return %arg0, %c0_i32 : i32, i32
  }
  func.func @transform_5(%arg0: i32) -> (i32, i32) {
    %c0_i32 = arith.constant 0 : i32
    %c0_i32_0 = arith.constant 0 : i32
    return %arg0, %c0_i32 : i32, i32
  }
}

</mosaic_0001>

<llo_original>
// kernel: tpu_custom_call.1
$region0: #{tpu_custom_call.1}
  #allocation0 [shape = 'u32[]', space=smem, size = 0x4, offset = 0x4, fixed_abs, tag = 'smem constant byte address 0x4 - core index']
  #allocation1 [shape = 'u32[144,128]{1,0:T(1,128)}', space=vmem, size = 0x12000, scoped, tag = 'internal scratch']
  %s0 = inlined_call_operand.hbm [shape: f32[8,8,32], index: 0, kind: input, shape index: {}]
  %s1 = inlined_call_operand.hbm [shape: f32[32,32], index: 1, kind: input, shape index: {}]
  %s2 = inlined_call_operand.vmem [shape: f32[1,32], index: 2, kind: input, shape index: {}]
  %s3 = inlined_call_operand.vmem [shape: f32[1,32], index: 3, kind: input, shape index: {}]
  %s4 = inlined_call_operand.hbm [shape: f32[8,32], index: 4, kind: output, shape index: {0}]
  %s5 = inlined_call_operand.hbm [shape: f32[8,8], index: 5, kind: output, shape index: {1}]
  %6 = xla_tuple %s4, %s5
  %s7 = sld [smem:[#allocation0]]
  $region42: #{tpu_custom_call.1} parent=0
    _
  %s9 = ssub.s32 1, %s7
  %s10 = scalar_select 0, %s9, %s7
  $region1: #{tpu_custom_call.1} parent=0
    #allocation2 [shape = 'u8[32768]{0}', space=vmem, size = 0x8000, scoped, tag = 'input window, operand 0, single buffered']
    #allocation3 [shape = 's32[1]{0}', space=sflag, size = 0x4, scoped, tag = 'scoped memory for tpu_custom_call.1']
    #allocation4 [shape = 's32[1]{0}', space=sflag, size = 0x4, scoped, tag = 'scoped memory for tpu_custom_call.1']
    #allocation5 [shape = 'u8[16384]{0}', space=vmem, size = 0x4000, scoped, tag = 'input window, operand 1, single buffered']
    #allocation6 [shape = 's32[1]{0}', space=sflag, size = 0x4, scoped, tag = 'scoped memory for tpu_custom_call.1']
    #allocation7 [shape = 'u8[4096]{0}', space=vmem, size = 0x1000, scoped, tag = 'output window, operand 0, single buffered']
    #allocation8 [shape = 'u8[4096]{0}', space=vmem, size = 0x1000, scoped, tag = 'output window, operand 1, single buffered']
    #allocation9 [shape = 's32[1]{0}', space=sflag, size = 0x4, scoped, tag = 'scoped memory for tpu_custom_call.1']
    %11 = vsyncpa [#allocation3], 0
    %12 = vsyncpa [#allocation6], 0
    %13 = vsyncpa [#allocation4], 0
    %14 = vsyncpa [#allocation9], 0
    // Predicated region
    $region2: #{tpu_custom_call.1} parent=1 // pred_check
      _
    $region3: #{tpu_custom_call.1} parent=1 // pred_check_branch
      %16 = sbr.rel (0) target = $region5
    $region4: #{tpu_custom_call.1} parent=1 // pred_region
      %s18 = ssub.s32 1024, 1024
      %19 = vsyncadd [#allocation3], %s18
      %s20 = sshll.u32 [#allocation2], 4
      %s21 = int_to_ptr.vmem [resolvable:$true] %s20
      %26 = dma.hbm_to_vmem [thread:$0]  %s0, 1024, %s21, [#allocation3], 128, 128, 8
    $region5: #{tpu_custom_call.1} parent=1 // pred_fallthru
      _
    // Predicated region
    $region6: #{tpu_custom_call.1} parent=1 // pred_check
      _
    $region7: #{tpu_custom_call.1} parent=1 // pred_check_branch
      %28 = sbr.rel (0) target = $region9
    $region8: #{tpu_custom_call.1} parent=1 // pred_region
      %s30 = ssub.s32 512, 512
      %31 = vsyncadd [#allocation6], %s30
      %s32 = sshll.u32 [#allocation5], 4
      %s33 = int_to_ptr.vmem [resolvable:$true] %s32
      %38 = dma.hbm_to_vmem [thread:$0]  %s1, 512, %s33, [#allocation6], 128, 128, 8
    $region9: #{tpu_custom_call.1} parent=1 // pred_fallthru
      _
    // Predicated region
    $region10: #{tpu_custom_call.1} parent=1 // pred_check
      _
    $region11: #{tpu_custom_call.1} parent=1 // pred_check_branch
      %40 = sbr.rel (0) target = $region13
    $region12: #{tpu_custom_call.1} parent=1 // pred_region
      _
    $region13: #{tpu_custom_call.1} parent=1 // pred_fallthru
      _
    // Predicated region
    $region14: #{tpu_custom_call.1} parent=1 // pred_check
      _
    $region15: #{tpu_custom_call.1} parent=1 // pred_check_branch
      %42 = sbr.rel (0) target = $region17
    $region16: #{tpu_custom_call.1} parent=1 // pred_region
      _
    $region17: #{tpu_custom_call.1} parent=1 // pred_fallthru
      _
    // Predicated region
    $region18: #{tpu_custom_call.1} parent=1 // pred_check
      _
    $region19: #{tpu_custom_call.1} parent=1 // pred_check_branch
      %44 = sbr.rel (0) target = $region21
    $region20: #{tpu_custom_call.1} parent=1 // pred_region
      %45 = dma.done [#allocation3], 1024
    $region21: #{tpu_custom_call.1} parent=1 // pred_fallthru
      _
    // Predicated region
    $region22: #{tpu_custom_call.1} parent=1 // pred_check
      _
    $region23: #{tpu_custom_call.1} parent=1 // pred_check_branch
      %47 = sbr.rel (0) target = $region25
    $region24: #{tpu_custom_call.1} parent=1 // pred_region
      %48 = dma.done [#allocation6], 512
    $region25: #{tpu_custom_call.1} parent=1 // pred_fallthru
      _
    %v49 = vld [vmem:[#allocation2] sm:$0xff]
    %v50 = vld [vmem:[#allocation2 + $0x8] sm:$0xff]
    %v51 = vld [vmem:[#allocation2 + $0x10] sm:$0xff]
    %v52 = vld [vmem:[#allocation2 + $0x18] sm:$0xff]
    %v53 = vld [vmem:[#allocation2 + $0x20] sm:$0xff]
    %v54 = vld [vmem:[#allocation2 + $0x28] sm:$0xff]
    %v55 = vld [vmem:[#allocation2 + $0x30] sm:$0xff]
    %v56 = vld [vmem:[#allocation2 + $0x38] sm:$0xff]
    %v57 = vld [vmem:[#allocation5] sm:$0xff]
    %v58 = vld [vmem:[#allocation5 + $0x8] sm:$0xff]
    %v59 = vld [vmem:[#allocation5 + $0x10] sm:$0xff]
    %v60 = vld [vmem:[#allocation5 + $0x18] sm:$0xff]
    %v61 = vld [vmem:[%s2] sm:$0x1]
    %v63 = vlaneseq
    %v64 = vshrl.u32 %v63, 7
    %v65 = vsub.s32 0, %v64
    %v66 = vrot.slane %v61, %v65
    %vm68 = vcmask 261120
    %v70 = vsel %vm68, %v49, 0
    %v73 = vsel %vm68, %v50, 0
    %v76 = vsel %vm68, %v51, 0
    %v79 = vsel %vm68, %v52, 0
    %v82 = vsel %vm68, %v53, 0
    %v85 = vsel %vm68, %v54, 0
    %v88 = vsel %vm68, %v55, 0
    %v91 = vsel %vm68, %v56, 0
    %93 = vmatprep.subr.mxu0 0.0
    %94 = vmatpush1.msra.mxu0 0.0
    %95 = vmatprep.subr.mxu0 0.0
    %96 = vmatpush1.msra.mxu0 0.0
    %97 = vmatprep.subr.mxu0 0.0
    %98 = vmatpush1.msra.mxu0 0.0
    %99 = vmatprep.subr.mxu0 0.0
    %100 = vmatpush1.msra.mxu0 0.0
    %101 = vmatprep.subr.mxu0 0.0
    %102 = vmatpush1.msra.mxu0 0.0
    %103 = vmatprep.subr.mxu0 0.0
    %104 = vmatpush1.msra.mxu0 0.0
    %105 = vmatprep.subr.mxu0 0.0
    %106 = vmatpush1.msra.mxu0 0.0
    %107 = vmatprep.subr.mxu0 0.0
    %108 = vmatpush1.msra.mxu0 0.0
    %109 = vmatprep.subr.mxu0 0.0
    %110 = vmatpush1.msra.mxu0 0.0
    %111 = vmatprep.subr.mxu0 0.0
    %112 = vmatpush1.msra.mxu0 0.0
    %113 = vmatprep.subr.mxu0 0.0
    %114 = vmatpush1.msra.mxu0 0.0
    %115 = vmatprep.subr.mxu0 0.0
    %116 = vmatpush1.msra.mxu0 0.0
    %117 = vmatprep.subr.mxu0 0.0
    %118 = vmatpush1.msra.mxu0 %v60
    %119 = vmatprep.subr.mxu0 0.0
    %120 = vmatpush1.msra.mxu0 %v59
    %121 = vmatprep.subr.mxu0 0.0
    %122 = vmatpush1.msra.mxu0 %v58
    %123 = vmatprep.subr.mxu0 0.0
    %124 = vmatpush1.msra.mxu0 %v57
    %125 = vmatprep.subr.mxu0 0.0
    %126 = vmatpush2.msra.mxu0 0.0
    %127 = vmatprep.subr.mxu0 0.0
    %128 = vmatpush2.msra.mxu0 0.0
    %129 = vmatprep.subr.mxu0 0.0
    %130 = vmatpush2.msra.mxu0 0.0
    %131 = vmatprep.subr.mxu0 0.0
    %132 = vmatpush2.msra.mxu0 0.0
    %133 = vmatprep.subr.mxu0 0.0
    %134 = vmatpush2.msra.mxu0 0.0
    %135 = vmatprep.subr.mxu0 0.0
    %136 = vmatpush2.msra.mxu0 0.0
    %137 = vmatprep.subr.mxu0 0.0
    %138 = vmatpush2.msra.mxu0 0.0
    %139 = vmatprep.subr.mxu0 0.0
    %140 = vmatpush2.msra.mxu0 0.0
    %141 = vmatprep.subr.mxu0 0.0
    %142 = vmatpush2.msra.mxu0 0.0
    %143 = vmatprep.subr.mxu0 0.0
    %144 = vmatpush2.msra.mxu0 0.0
    %145 = vmatprep.subr.mxu0 0.0
    %146 = vmatpush2.msra.mxu0 0.0
    %147 = vmatprep.subr.mxu0 0.0
    %148 = vmatpush2.msra.mxu0 0.0
    %149 = vmatprep.subr.mxu0 0.0
    %150 = vmatpush2.msra.mxu0 0.0
    %151 = vmatprep.subr.mxu0 0.0
    %152 = vmatpush2.msra.mxu0 0.0
    %153 = vmatprep.subr.mxu0 0.0
    %154 = vmatpush2.msra.mxu0 0.0
    %155 = vmatprep.subr.mxu0 0.0
    %156 = vmatpush2.msra.mxu0 0.0
    %157 = vmatprep.mubr.f32.mxu0 0.0
    %158 = vmatmul.mubr.f32.gmra.mxu0 %v70
    %v159 = vpop.f32.mrf.mxu0
    %v160 = vadd.f32 %v66, %v159
    %v161 = vpop.f32.mrf.mxu0
    %162 = vmatprep.mubr.f32.mxu0 0.0
    %163 = vmatmul.mubr.f32.gmra.mxu0 %v73
    %v164 = vpop.f32.mrf.mxu0
    %v165 = vadd.f32 %v66, %v164
    %v166 = vpop.f32.mrf.mxu0
    %167 = vmatprep.mubr.f32.mxu0 0.0
    %168 = vmatmul.mubr.f32.gmra.mxu0 %v76
    %v169 = vpop.f32.mrf.mxu0
    %v170 = vadd.f32 %v66, %v169
    %v171 = vpop.f32.mrf.mxu0
    %172 = vmatprep.mubr.f32.mxu0 0.0
    %173 = vmatmul.mubr.f32.gmra.mxu0 %v79
    %v174 = vpop.f32.mrf.mxu0
    %v175 = vadd.f32 %v66, %v174
    %v176 = vpop.f32.mrf.mxu0
    %177 = vmatprep.mubr.f32.mxu0 0.0
    %178 = vmatmul.mubr.f32.gmra.mxu0 %v82
    %v179 = vpop.f32.mrf.mxu0
    %v180 = vadd.f32 %v66, %v179
    %v181 = vpop.f32.mrf.mxu0
    %182 = vmatprep.mubr.f32.mxu0 0.0
    %183 = vmatmul.mubr.f32.gmra.mxu0 %v85
    %v184 = vpop.f32.mrf.mxu0
    %v185 = vadd.f32 %v66, %v184
    %v186 = vpop.f32.mrf.mxu0
    %187 = vmatprep.mubr.f32.mxu0 0.0
    %188 = vmatmul.mubr.f32.gmra.mxu0 %v88
    %v189 = vpop.f32.mrf.mxu0
    %v190 = vadd.f32 %v66, %v189
    %v191 = vpop.f32.mrf.mxu0
    %192 = vmatprep.mubr.f32.mxu0 0.0
    %193 = vmatmul.mubr.f32.gmra.mxu0 %v91
    %v194 = vpop.f32.mrf.mxu0
    %v195 = vadd.f32 %v66, %v194
    %v196 = vpop.f32.mrf.mxu0
    %197 = vdwg.mxu0
    %vm198 = vcmp.ge.f32.partialorder %v160, 0.0
    %vm199 = vcmp.ge.f32.partialorder %v165, 0.0
    %vm200 = vcmp.ge.f32.partialorder %v170, 0.0
    %vm201 = vcmp.ge.f32.partialorder %v175, 0.0
    %vm202 = vcmp.ge.f32.partialorder %v180, 0.0
    %vm203 = vcmp.ge.f32.partialorder %v185, 0.0
    %vm204 = vcmp.ge.f32.partialorder %v190, 0.0
    %vm205 = vcmp.ge.f32.partialorder %v195, 0.0
    %v206 = vmul.f32 %v160, 0.01
    %v207 = vmul.f32 %v165, 0.01
    %v208 = vmul.f32 %v170, 0.01
    %v209 = vmul.f32 %v175, 0.01
    %v210 = vmul.f32 %v180, 0.01
    %v211 = vmul.f32 %v185, 0.01
    %v212 = vmul.f32 %v190, 0.01
    %v213 = vmul.f32 %v195, 0.01
    %v214 = vsel %vm198, %v160, %v206
    %v215 = vsel %vm199, %v165, %v207
    %v216 = vsel %vm200, %v170, %v208
    %v217 = vsel %vm201, %v175, %v209
    %v218 = vsel %vm202, %v180, %v210
    %v219 = vsel %vm203, %v185, %v211
    %v220 = vsel %vm204, %v190, %v212
    %v221 = vsel %vm205, %v195, %v213
    %v222 = vld [vmem:[%s3] sm:$0x1]
    %v224 = vlaneseq
    %v225 = vshrl.u32 %v224, 7
    %v226 = vsub.s32 0, %v225
    %v227 = vrot.slane %v222, %v226
    %v229 = vmul.f32 %v214, %v227
    %v230 = vmul.f32 %v215, %v227
    %v231 = vmul.f32 %v216, %v227
    %v232 = vmul.f32 %v217, %v227
    %v233 = vmul.f32 %v218, %v227
    %v234 = vmul.f32 %v219, %v227
    %v235 = vmul.f32 %v220, %v227
    %v236 = vmul.f32 %v221, %v227
    %v237 = vsel %vm68, %v229, 0.0
    %238 = vadd.xlane.f32.xlu0 %v237
    %v239 = vpop.xlane.xlu0 %238
    %v240 = vsel %vm68, %v230, 0.0
    %241 = vadd.xlane.f32.xlu0 %v240
    %v242 = vpop.xlane.xlu0 %241
    %v243 = vsel %vm68, %v231, 0.0
    %244 = vadd.xlane.f32.xlu0 %v243
    %v245 = vpop.xlane.xlu0 %244
    %v246 = vsel %vm68, %v232, 0.0
    %247 = vadd.xlane.f32.xlu0 %v246
    %v248 = vpop.xlane.xlu0 %247
    %v249 = vsel %vm68, %v233, 0.0
    %250 = vadd.xlane.f32.xlu0 %v249
    %v251 = vpop.xlane.xlu0 %250
    %v252 = vsel %vm68, %v234, 0.0
    %253 = vadd.xlane.f32.xlu0 %v252
    %v254 = vpop.xlane.xlu0 %253
    %v255 = vsel %vm68, %v235, 0.0
    %256 = vadd.xlane.f32.xlu0 %v255
    %v257 = vpop.xlane.xlu0 %256
    %v258 = vsel %vm68, %v236, 0.0
    %259 = vadd.xlane.f32.xlu0 %v258
    %v260 = vpop.xlane.xlu0 %259
    %v269 = vlaneseq
    %v270 = vand.u32 %v269, 127
    %v271 = vlaneseq
    %v272 = vshrl.u32 %v271, 7
    %v273 = vsub.s32 %v270, %v272
    %v274 = vrot.slane %v239, %v273
    %v275 = vlaneseq
    %v276 = vshrl.u32 %v275, 7
    %v277 = vsub.s32 %v270, %v276
    %v278 = vrot.slane %v242, %v277
    %v279 = vlaneseq
    %v280 = vshrl.u32 %v279, 7
    %v281 = vsub.s32 %v270, %v280
    %v282 = vrot.slane %v245, %v281
    %v283 = vlaneseq
    %v284 = vshrl.u32 %v283, 7
    %v285 = vsub.s32 %v270, %v284
    %v286 = vrot.slane %v248, %v285
    %v287 = vlaneseq
    %v288 = vshrl.u32 %v287, 7
    %v289 = vsub.s32 %v270, %v288
    %v290 = vrot.slane %v251, %v289
    %v291 = vlaneseq
    %v292 = vshrl.u32 %v291, 7
    %v293 = vsub.s32 %v270, %v292
    %v294 = vrot.slane %v254, %v293
    %v295 = vlaneseq
    %v296 = vshrl.u32 %v295, 7
    %v297 = vsub.s32 %v270, %v296
    %v298 = vrot.slane %v257, %v297
    %v299 = vlaneseq
    %v300 = vshrl.u32 %v299, 7
    %v301 = vsub.s32 %v270, %v300
    %v302 = vrot.slane %v260, %v301
    %vm303 = vcmask 1041409
    %v304 = vsel %vm303, %v278, %v274
    %vm305 = vcmask 1042434
    %v306 = vsel %vm305, %v282, %v304
    %vm307 = vcmask 1043459
    %v308 = vsel %vm307, %v286, %v306
    %vm309 = vcmask 1044484
    %v310 = vsel %vm309, %v290, %v308
    %vm311 = vcmask 1045509
    %v312 = vsel %vm311, %v294, %v310
    %vm313 = vcmask 1046534
    %v314 = vsel %vm313, %v298, %v312
    %vm315 = vcmask 1047559
    %v316 = vsel %vm315, %v302, %v314
    %vm318 = vcmask 64512
    %v319 = vsel %vm318, %v316, -inf
    %320 = vmax.xlane.f32.xlu0 %v319
    %v321 = vpop.xlane.xlu0 %320
    %v323 = vlaneseq
    %v324 = vshrl.u32 %v323, 7
    %v325 = vsub.s32 0, %v324
    %v326 = vrot.slane %v321, %v325
    %v327 = vlaneseq
    %v328 = vshrl.u32 %v327, 7
    %v329 = vsub.s32 1, %v328
    %v330 = vrot.slane %v321, %v329
    %v331 = vlaneseq
    %v332 = vshrl.u32 %v331, 7
    %v333 = vsub.s32 2, %v332
    %v334 = vrot.slane %v321, %v333
    %v335 = vlaneseq
    %v336 = vshrl.u32 %v335, 7
    %v337 = vsub.s32 3, %v336
    %v338 = vrot.slane %v321, %v337
    %v339 = vlaneseq
    %v340 = vshrl.u32 %v339, 7
    %v341 = vsub.s32 4, %v340
    %v342 = vrot.slane %v321, %v341
    %v343 = vlaneseq
    %v344 = vshrl.u32 %v343, 7
    %v345 = vsub.s32 5, %v344
    %v346 = vrot.slane %v321, %v345
    %v347 = vlaneseq
    %v348 = vshrl.u32 %v347, 7
    %v349 = vsub.s32 6, %v348
    %v350 = vrot.slane %v321, %v349
    %v351 = vlaneseq
    %v352 = vshrl.u32 %v351, 7
    %v353 = vsub.s32 7, %v352
    %v354 = vrot.slane %v321, %v353
    %v363 = vsub.f32 %v239, %v326
    %v364 = vsub.f32 %v242, %v330
    %v365 = vsub.f32 %v245, %v334
    %v366 = vsub.f32 %v248, %v338
    %v367 = vsub.f32 %v251, %v342
    %v368 = vsub.f32 %v254, %v346
    %v369 = vsub.f32 %v257, %v350
    %v370 = vsub.f32 %v260, %v354
    %v371 = vmul.f32 %v363, 1.442695
    %v372 = vpow.pop %v371
    %v373 = vmul.f32 %v364, 1.442695
    %v374 = vpow.pop %v373
    %v375 = vmul.f32 %v365, 1.442695
    %v376 = vpow.pop %v375
    %v377 = vmul.f32 %v366, 1.442695
    %v378 = vpow.pop %v377
    %v379 = vmul.f32 %v367, 1.442695
    %v380 = vpow.pop %v379
    %v381 = vmul.f32 %v368, 1.442695
    %v382 = vpow.pop %v381
    %v383 = vmul.f32 %v369, 1.442695
    %v384 = vpow.pop %v383
    %v385 = vmul.f32 %v370, 1.442695
    %v386 = vpow.pop %v385
    %395 = vset.pattern.permute.xlu0 0
    %396 = vperm.xlu0 %395, %v372
    %v397 = vpop.permute.xlu0 %396
    %398 = vset.pattern.permute.xlu0 0
    %399 = vperm.xlu0 %398, %v374
    %v400 = vpop.permute.xlu0 %399
    %401 = vset.pattern.permute.xlu0 0
    %402 = vperm.xlu0 %401, %v376
    %v403 = vpop.permute.xlu0 %402
    %404 = vset.pattern.permute.xlu0 0
    %405 = vperm.xlu0 %404, %v378
    %v406 = vpop.permute.xlu0 %405
    %407 = vset.pattern.permute.xlu0 0
    %408 = vperm.xlu0 %407, %v380
    %v409 = vpop.permute.xlu0 %408
    %410 = vset.pattern.permute.xlu0 0
    %411 = vperm.xlu0 %410, %v382
    %v412 = vpop.permute.xlu0 %411
    %413 = vset.pattern.permute.xlu0 0
    %414 = vperm.xlu0 %413, %v384
    %v415 = vpop.permute.xlu0 %414
    %416 = vset.pattern.permute.xlu0 0
    %417 = vperm.xlu0 %416, %v386
    %v418 = vpop.permute.xlu0 %417
    %v419 = vlaneseq
    %v420 = vshrl.u32 %v419, 7
    %v421 = vsub.s32 %v270, %v420
    %v422 = vrot.slane %v397, %v421
    %v423 = vlaneseq
    %v424 = vshrl.u32 %v423, 7
    %v425 = vsub.s32 %v270, %v424
    %v426 = vrot.slane %v400, %v425
    %v427 = vlaneseq
    %v428 = vshrl.u32 %v427, 7
    %v429 = vsub.s32 %v270, %v428
    %v430 = vrot.slane %v403, %v429
    %v431 = vlaneseq
    %v432 = vshrl.u32 %v431, 7
    %v433 = vsub.s32 %v270, %v432
    %v434 = vrot.slane %v406, %v433
    %v435 = vlaneseq
    %v436 = vshrl.u32 %v435, 7
    %v437 = vsub.s32 %v270, %v436
    %v438 = vrot.slane %v409, %v437
    %v439 = vlaneseq
    %v440 = vshrl.u32 %v439, 7
    %v441 = vsub.s32 %v270, %v440
    %v442 = vrot.slane %v412, %v441
    %v443 = vlaneseq
    %v444 = vshrl.u32 %v443, 7
    %v445 = vsub.s32 %v270, %v444
    %v446 = vrot.slane %v415, %v445
    %v447 = vlaneseq
    %v448 = vshrl.u32 %v447, 7
    %v449 = vsub.s32 %v270, %v448
    %v450 = vrot.slane %v418, %v449
    %v451 = vsel %vm303, %v426, %v422
    %v452 = vsel %vm305, %v430, %v451
    %v453 = vsel %vm307, %v434, %v452
    %v454 = vsel %vm309, %v438, %v453
    %v455 = vsel %vm311, %v442, %v454
    %v456 = vsel %vm313, %v446, %v455
    %v457 = vsel %vm315, %v450, %v456
    %v459 = vsel %vm318, %v457, 0.0
    %460 = vadd.xlane.f32.xlu0 %v459
    %v461 = vpop.xlane.xlu0 %460
    %v462 = vrcp.pop %v461
    %v464 = vlaneseq
    %v465 = vshrl.u32 %v464, 7
    %v466 = vsub.s32 0, %v465
    %v467 = vrot.slane %v462, %v466
    %v468 = vlaneseq
    %v469 = vshrl.u32 %v468, 7
    %v470 = vsub.s32 1, %v469
    %v471 = vrot.slane %v462, %v470
    %v472 = vlaneseq
    %v473 = vshrl.u32 %v472, 7
    %v474 = vsub.s32 2, %v473
    %v475 = vrot.slane %v462, %v474
    %v476 = vlaneseq
    %v477 = vshrl.u32 %v476, 7
    %v478 = vsub.s32 3, %v477
    %v479 = vrot.slane %v462, %v478
    %v480 = vlaneseq
    %v481 = vshrl.u32 %v480, 7
    %v482 = vsub.s32 4, %v481
    %v483 = vrot.slane %v462, %v482
    %v484 = vlaneseq
    %v485 = vshrl.u32 %v484, 7
    %v486 = vsub.s32 5, %v485
    %v487 = vrot.slane %v462, %v486
    %v488 = vlaneseq
    %v489 = vshrl.u32 %v488, 7
    %v490 = vsub.s32 6, %v489
    %v491 = vrot.slane %v462, %v490
    %v492 = vlaneseq
    %v493 = vshrl.u32 %v492, 7
    %v494 = vsub.s32 7, %v493
    %v495 = vrot.slane %v462, %v494
    %v504 = vmul.f32 %v372, %v467
    %v505 = vmul.f32 %v374, %v471
    %v506 = vmul.f32 %v376, %v475
    %v507 = vmul.f32 %v378, %v479
    %v508 = vmul.f32 %v380, %v483
    %v509 = vmul.f32 %v382, %v487
    %v510 = vmul.f32 %v384, %v491
    %v511 = vmul.f32 %v386, %v495
    %513 = vset.pattern.permute.xlu0 0
    %514 = vperm.xlu0 %513, %v504
    %v515 = vpop.permute.xlu0 %514
    %518 = vset.pattern.permute.xlu0 0
    %519 = vperm.xlu0 %518, %v505
    %v520 = vpop.permute.xlu0 %519
    %523 = vset.pattern.permute.xlu0 0
    %524 = vperm.xlu0 %523, %v506
    %v525 = vpop.permute.xlu0 %524
    %528 = vset.pattern.permute.xlu0 0
    %529 = vperm.xlu0 %528, %v507
    %v530 = vpop.permute.xlu0 %529
    %533 = vset.pattern.permute.xlu0 0
    %534 = vperm.xlu0 %533, %v508
    %v535 = vpop.permute.xlu0 %534
    %538 = vset.pattern.permute.xlu0 0
    %539 = vperm.xlu0 %538, %v509
    %v540 = vpop.permute.xlu0 %539
    %543 = vset.pattern.permute.xlu0 0
    %544 = vperm.xlu0 %543, %v510
    %v545 = vpop.permute.xlu0 %544
    %548 = vset.pattern.permute.xlu0 0
    %549 = vperm.xlu0 %548, %v511
    %v550 = vpop.permute.xlu0 %549
    %v552 = vmul.f32 %v515, %v49
    %v553 = vmul.f32 %v520, %v50
    %v554 = vmul.f32 %v525, %v51
    %v555 = vmul.f32 %v530, %v52
    %v556 = vmul.f32 %v535, %v53
    %v557 = vmul.f32 %v540, %v54
    %v558 = vmul.f32 %v545, %v55
    %v559 = vmul.f32 %v550, %v56
    %v560 = vsel %vm68, %v552, 0.0
    %v561 = vrot.slane %v560, 4
    %v562 = vadd.f32 %v560, %v561
    %v563 = vrot.slane %v562, 2
    %v564 = vadd.f32 %v562, %v563
    %v565 = vrot.slane %v564, 1
    %v566 = vadd.f32 %v564, %v565
    %v567 = vsel %vm68, %v553, 0.0
    %v568 = vrot.slane %v567, 4
    %v569 = vadd.f32 %v567, %v568
    %v570 = vrot.slane %v569, 2
    %v571 = vadd.f32 %v569, %v570
    %v572 = vrot.slane %v571, 1
    %v573 = vadd.f32 %v571, %v572
    %v574 = vsel %vm68, %v554, 0.0
    %v575 = vrot.slane %v574, 4
    %v576 = vadd.f32 %v574, %v575
    %v577 = vrot.slane %v576, 2
    %v578 = vadd.f32 %v576, %v577
    %v579 = vrot.slane %v578, 1
    %v580 = vadd.f32 %v578, %v579
    %v581 = vsel %vm68, %v555, 0.0
    %v582 = vrot.slane %v581, 4
    %v583 = vadd.f32 %v581, %v582
    %v584 = vrot.slane %v583, 2
    %v585 = vadd.f32 %v583, %v584
    %v586 = vrot.slane %v585, 1
    %v587 = vadd.f32 %v585, %v586
    %v588 = vsel %vm68, %v556, 0.0
    %v589 = vrot.slane %v588, 4
    %v590 = vadd.f32 %v588, %v589
    %v591 = vrot.slane %v590, 2
    %v592 = vadd.f32 %v590, %v591
    %v593 = vrot.slane %v592, 1
    %v594 = vadd.f32 %v592, %v593
    %v595 = vsel %vm68, %v557, 0.0
    %v596 = vrot.slane %v595, 4
    %v597 = vadd.f32 %v595, %v596
    %v598 = vrot.slane %v597, 2
    %v599 = vadd.f32 %v597, %v598
    %v600 = vrot.slane %v599, 1
    %v601 = vadd.f32 %v599, %v600
    %v602 = vsel %vm68, %v558, 0.0
    %v603 = vrot.slane %v602, 4
    %v604 = vadd.f32 %v602, %v603
    %v605 = vrot.slane %v604, 2
    %v606 = vadd.f32 %v604, %v605
    %v607 = vrot.slane %v606, 1
    %v608 = vadd.f32 %v606, %v607
    %v609 = vsel %vm68, %v559, 0.0
    %v610 = vrot.slane %v609, 4
    %v611 = vadd.f32 %v609, %v610
    %v612 = vrot.slane %v611, 2
    %v613 = vadd.f32 %v611, %v612
    %v614 = vrot.slane %v613, 1
    %v615 = vadd.f32 %v613, %v614
    %v624 = vsel %vm303, %v573, %v566
    %v625 = vsel %vm305, %v580, %v624
    %v626 = vsel %vm307, %v587, %v625
    %v627 = vsel %vm309, %v594, %v626
    %v628 = vsel %vm311, %v601, %v627
    %v629 = vsel %vm313, %v608, %v628
    %v630 = vsel %vm315, %v615, %v629
    %632 = vst.msk [vmem:[#allocation7] sm:$0xff] %vm68, %v630
    %v633 = vlaneseq
    %v634 = vshrl.u32 %v633, 7
    %v635 = vsub.s32 %v270, %v634
    %v636 = vrot.slane %v515, %v635
    %v637 = vlaneseq
    %v638 = vshrl.u32 %v637, 7
    %v639 = vsub.s32 %v270, %v638
    %v640 = vrot.slane %v520, %v639
    %v641 = vlaneseq
    %v642 = vshrl.u32 %v641, 7
    %v643 = vsub.s32 %v270, %v642
    %v644 = vrot.slane %v525, %v643
    %v645 = vlaneseq
    %v646 = vshrl.u32 %v645, 7
    %v647 = vsub.s32 %v270, %v646
    %v648 = vrot.slane %v530, %v647
    %v649 = vlaneseq
    %v650 = vshrl.u32 %v649, 7
    %v651 = vsub.s32 %v270, %v650
    %v652 = vrot.slane %v535, %v651
    %v653 = vlaneseq
    %v654 = vshrl.u32 %v653, 7
    %v655 = vsub.s32 %v270, %v654
    %v656 = vrot.slane %v540, %v655
    %v657 = vlaneseq
    %v658 = vshrl.u32 %v657, 7
    %v659 = vsub.s32 %v270, %v658
    %v660 = vrot.slane %v545, %v659
    %v661 = vlaneseq
    %v662 = vshrl.u32 %v661, 7
    %v663 = vsub.s32 %v270, %v662
    %v664 = vrot.slane %v550, %v663
    %v665 = vsel %vm303, %v640, %v636
    %v666 = vsel %vm305, %v644, %v665
    %v667 = vsel %vm307, %v648, %v666
    %v668 = vsel %vm309, %v652, %v667
    %v669 = vsel %vm311, %v656, %v668
    %v670 = vsel %vm313, %v660, %v669
    %v671 = vsel %vm315, %v664, %v670
    %673 = vst.msk [vmem:[#allocation8] sm:$0xff] %vm318, %v671
    // Predicated region
    $region26: #{tpu_custom_call.1} parent=1 // pred_check
      _
    $region27: #{tpu_custom_call.1} parent=1 // pred_check_branch
      %675 = sbr.rel (0) target = $region29
    $region28: #{tpu_custom_call.1} parent=1 // pred_region
      %s677 = ssub.s32 128, 128
      %678 = vsyncadd [#allocation4], %s677
      %s680 = sshll.u32 [#allocation7], 4
      %s681 = int_to_ptr.vmem [resolvable:$true] %s680
      %683 = dma.vmem_to_hbm [thread:$0]  %s681, 128, %s4, [#allocation4]
    $region29: #{tpu_custom_call.1} parent=1 // pred_fallthru
      _
    // Predicated region
    $region30: #{tpu_custom_call.1} parent=1 // pred_check
      _
    $region31: #{tpu_custom_call.1} parent=1 // pred_check_branch
      %685 = sbr.rel (0) target = $region33
    $region32: #{tpu_custom_call.1} parent=1 // pred_region
      %s687 = ssub.s32 128, 128
      %688 = vsyncadd [#allocation9], %s687
      %s690 = sshll.u32 [#allocation8], 4
      %s691 = int_to_ptr.vmem [resolvable:$true] %s690
      %693 = dma.vmem_to_hbm [thread:$0]  %s691, 128, %s5, [#allocation9]
    $region33: #{tpu_custom_call.1} parent=1 // pred_fallthru
      _
    // Predicated region
    $region34: #{tpu_custom_call.1} parent=1 // pred_check
      _
    $region35: #{tpu_custom_call.1} parent=1 // pred_check_branch
      %695 = sbr.rel (0) target = $region37
    $region36: #{tpu_custom_call.1} parent=1 // pred_region
      %696 = dma.done [#allocation4], 128
    $region37: #{tpu_custom_call.1} parent=1 // pred_fallthru
      _
    // Predicated region
    $region38: #{tpu_custom_call.1} parent=1 // pred_check
      _
    $region39: #{tpu_custom_call.1} parent=1 // pred_check_branch
      %698 = sbr.rel (0) target = $region41
    $region40: #{tpu_custom_call.1} parent=1 // pred_region
      %699 = dma.done [#allocation9], 128
    $region41: #{tpu_custom_call.1} parent=1 // pred_fallthru
      _
    %700 = vsyncpa [#allocation3], 1
    %701 = vsyncpa [#allocation6], 1
    %702 = vsyncpa [#allocation4], 1
    %703 = vsyncpa [#allocation9], 1

</llo_original>
